<compile_context>
chip_gen: v5e
topology: v5e:2x2
jax: 0.10.0
libtpu: 0.0.40
codegen_flags: <defaults>
</compile_context>

<pallas_src>
import math

import jax
import jax.numpy as jnp
from jax.experimental import pallas as pl
from jax.experimental.pallas import tpu as pltpu


LANES = 128
MAX_DMA_IN_FLIGHT = 4  # concurrent HBM->HBM chunk copies (uses multiple DMA engines)


def _resolve_shape(target_shape, total):
    """torch.reshape semantics: resolve a single -1 with static host math."""
    shape = list(target_shape)
    if -1 in shape:
        known = math.prod(s for s in shape if s != -1)
        if known == 0:
            shape[shape.index(-1)] = 0  # only legal when total == 0
        else:
            shape[shape.index(-1)] = total // known
    shape = tuple(int(s) for s in shape)
    assert math.prod(shape) == total, "reshape size mismatch"
    return shape


def _choose_width(total):
    """Largest lane-dense (multiple-of-128) row width that divides `total`."""
    for width in (8192, 4096, 2048, 1024, 512, 256, 128):
        if total % width == 0:
            return width
    return None


def _row_chunks(rows, row_align, max_dma):
    """Static (start, size) row ranges covering [0, rows).

    At most `max_dma` chunks; every chunk start is a multiple of `row_align`
    so each DMA covers a contiguous, sublane-tile-aligned byte range.
    """
    if rows <= row_align:
        return ((0, rows),)
    n = min(max_dma, -(-rows // row_align))
    per = -(-rows // n)                      # ceil(rows / n)
    per = -(-per // row_align) * row_align   # round up to sublane granularity
    chunks = []
    start = 0
    while start < rows:
        size = min(per, rows - start)
        chunks.append((start, size))
        start += size
    return tuple(chunks)


def _make_hbm_copy_kernel(row_chunks):
    """Kernel: copy a (rows, width) slab HBM->HBM via concurrent chunk DMAs.

    No VMEM staging, no vld/vst slot work, no grid steps — the DMA engines
    stream at HBM line rate, independent of TensorCore count (v5e/v6e/v7x).
    """

    def kernel(x_hbm, o_hbm, sems):
        copies = []
        for idx, (start, size) in enumerate(row_chunks):
            cp = pltpu.make_async_copy(
                x_hbm.at[pl.ds(start, size), :],
                o_hbm.at[pl.ds(start, size), :],
                sems.at[idx],
            )
            cp.start()
            copies.append(cp)
        # All chunk DMAs are in flight; block until every one completes.
        for cp in copies:
            cp.wait()

    return kernel


def pallas_reshape(x, target_shape, *, force_copy=False):
    """Reshape `x` to `target_shape` (C-order, torch.reshape -1 semantics).

    Default: metadata-only relabel (the true fast path — reshape moves no
    bytes).  With `force_copy=True`, materializes a fresh buffer via a
    chunked HBM->HBM DMA Pallas kernel.
    """
    total = x.size
    shape = _resolve_shape(target_shape, total)

    # Fast path (default): metadata-only.  Also used for empty arrays.
    if not force_copy or total == 0:
        return jnp.reshape(x, shape)

    width = _choose_width(total)
    if width is None:
        # Element count not a multiple of 128.  JAX arrays are immutable, so a
        # forced copy is observationally identical to the metadata relabel.
        # TODO(synk): 1-D HBM->HBM DMA for non-lane-aligned element counts.
        return jnp.reshape(x, shape)

    itemsize = jnp.dtype(x.dtype).itemsize
    rows = total // width
    # Sublane granularity: 8 rows (f32), 16 (bf16), 32 (int8 / fp8).
    row_align = max(8, 32 // max(itemsize, 1))
    chunks = _row_chunks(rows, row_align, MAX_DMA_IN_FLIGHT)

    # Metadata-only relabel of the C-order element stream into a lane-dense
    # 2-D slab; no pad, no slice -> no extra HBM passes around the kernel.
    slab = jnp.reshape(x, (rows, width))

    out_slab = pl.pallas_call(
        _make_hbm_copy_kernel(chunks),
        out_shape=jax.ShapeDtypeStruct((rows, width), x.dtype),
        in_specs=[pl.BlockSpec(memory_space=pl.ANY)],   # raw HBM ref, no auto-DMA
        out_specs=pl.BlockSpec(memory_space=pl.ANY),    # raw HBM ref, no auto-DMA
        scratch_shapes=[pltpu.SemaphoreType.DMA((len(chunks),))],
        # Pure-bandwidth hint for XLA's scheduler (zero FLOPs).
        cost_estimate=pl.CostEstimate(
            flops=0,
            transcendentals=0,
            bytes_accessed=2 * total * itemsize,
        ),
    )(slab)

    return jnp.reshape(out_slab, shape)


class Reshape:
    """JAX/Pallas equivalent of the PyTorch Reshape nn.Module."""

    def __init__(self, *shape, force_copy=False):
        self.shape = shape
        self.force_copy = force_copy

    def __call__(self, x):
        return pallas_reshape(x, self.shape, force_copy=self.force_copy)


if __name__ == "__main__":
    key = jax.random.PRNGKey(0)
    # Small NCHW-style input consistent with typical conv feature maps.
    x = jax.random.normal(key, (2, 4, 16, 16), dtype=jnp.float32)
    ref = jnp.reshape(x, (2, 4, 256))

    # Default (fast) path: metadata-only reshape, no kernel, no HBM traffic.
    y_meta = jax.block_until_ready(Reshape(2, 4, 256)(x))
    assert y_meta.shape == (2, 4, 256)
    assert y_meta.dtype == x.dtype
    assert bool(jnp.array_equal(y_meta, ref))

    # Forced-copy path: exercises the HBM->HBM DMA Pallas kernel.
    y_copy = jax.block_until_ready(Reshape(2, 4, 256, force_copy=True)(x))
    assert y_copy.shape == (2, 4, 256)
    assert y_copy.dtype == x.dtype
    assert bool(jnp.array_equal(y_copy, ref))

    # -1 resolution (torch reshape semantics) through the copy kernel.
    y2 = jax.block_until_ready(Reshape(8, -1, force_copy=True)(x))
    assert bool(jnp.array_equal(y2, jnp.reshape(x, (8, 256))))

    # Sub-32-bit dtype (packed sublanes) through the copy kernel stays exact.
    xb = x.astype(jnp.bfloat16)
    y3 = jax.block_until_ready(Reshape(2, -1, force_copy=True)(xb))
    assert y3.dtype == jnp.bfloat16
    assert bool(jnp.array_equal(y3, jnp.reshape(xb, (2, 1024))))

    print("KERNEL_OK")
</pallas_src>

<mosaic_0001>
module attributes {stable_mosaic.version = 11 : i64} {
  func.func @kernel(%arg0: memref<1x2048xf32, #tpu.memory_space<any>>, %arg1: memref<1x2048xf32, #tpu.memory_space<any>>, %arg2: memref<1x!tpu.dma_semaphore, #tpu.memory_space<semaphore_mem>>) attributes {dimension_semantics = [], scalar_prefetch = 0 : i64, scratch_operands = 1 : i64, tpu.core_type = #tpu.core_type<tc>} {
    %c0_i32 = arith.constant 0 : i32
    %c0_i32_0 = arith.constant 0 : i32
    %c0_i32_1 = arith.constant 0 : i32
    %0 = tpu.memref_slice %arg0[%c0_i32_0, %c0_i32_1] : memref<1x2048xf32, #tpu.memory_space<any>> -> memref<1x2048xf32, #tpu.memory_space<any>>
    %c0_i32_2 = arith.constant 0 : i32
    %c0_i32_3 = arith.constant 0 : i32
    %1 = tpu.memref_slice %arg1[%c0_i32_2, %c0_i32_3] : memref<1x2048xf32, #tpu.memory_space<any>> -> memref<1x2048xf32, #tpu.memory_space<any>>
    %2 = tpu.memref_slice %arg2[%c0_i32] : memref<1x!tpu.dma_semaphore, #tpu.memory_space<semaphore_mem>> -> memref<1x!tpu.dma_semaphore, #tpu.memory_space<semaphore_mem>>
    %3 = tpu.memref_squeeze %2 : memref<1x!tpu.dma_semaphore, #tpu.memory_space<semaphore_mem>> -> memref<!tpu.dma_semaphore, #tpu.memory_space<semaphore_mem>>
    tpu.enqueue_dma source(%0 : memref<1x2048xf32, #tpu.memory_space<any>>) target(%1 : memref<1x2048xf32, #tpu.memory_space<any>>) target_semaphore(%3 : memref<!tpu.dma_semaphore, #tpu.memory_space<semaphore_mem>>)
    %c0_i32_4 = arith.constant 0 : i32
    %c0_i32_5 = arith.constant 0 : i32
    %c0_i32_6 = arith.constant 0 : i32
    %4 = tpu.memref_slice %arg0[%c0_i32_5, %c0_i32_6] : memref<1x2048xf32, #tpu.memory_space<any>> -> memref<1x2048xf32, #tpu.memory_space<any>>
    %c0_i32_7 = arith.constant 0 : i32
    %c0_i32_8 = arith.constant 0 : i32
    %5 = tpu.memref_slice %arg1[%c0_i32_7, %c0_i32_8] : memref<1x2048xf32, #tpu.memory_space<any>> -> memref<1x2048xf32, #tpu.memory_space<any>>
    %6 = tpu.memref_slice %arg2[%c0_i32_4] : memref<1x!tpu.dma_semaphore, #tpu.memory_space<semaphore_mem>> -> memref<1x!tpu.dma_semaphore, #tpu.memory_space<semaphore_mem>>
    %7 = tpu.memref_squeeze %6 : memref<1x!tpu.dma_semaphore, #tpu.memory_space<semaphore_mem>> -> memref<!tpu.dma_semaphore, #tpu.memory_space<semaphore_mem>>
    tpu.wait_dma2 semaphore(%7 : memref<!tpu.dma_semaphore, #tpu.memory_space<semaphore_mem>>) src(%4 : memref<1x2048xf32, #tpu.memory_space<any>>) dst(%5 : memref<1x2048xf32, #tpu.memory_space<any>>)
    return
  }
}

</mosaic_0001>

<llo_original>
// kernel: tpu_custom_call.1
$region0: #{tpu_custom_call.1}
  #allocation0 [shape = 'u32[]', space=smem, size = 0x4, offset = 0x4, fixed_abs, tag = 'smem constant byte address 0x4 - core index']
  #allocation1 [shape = 'u32[72,128]{1,0:T(1,128)}', space=vmem, size = 0x9000, scoped, tag = 'internal scratch']
  #allocation2 [shape = 's32[1]{0}', space=sflag, size = 0x4, scoped, tag = 'scratch operand']
  #allocation3 [shape = 's32[]', space=sflag, size = 0x4, offset = 0, fixed_abs, tag = 'sflag constant byte address 0x0 - dummy sync flag']
  #allocation4 [shape = 'u32[0]{0}', space=smem, size = 0, offset = 0, fixed_abs, tag = 'smem constant byte address 0x0 - null']
  %s0 = inlined_call_operand.hbm [shape: f32[1,2048], index: 0, kind: input, shape index: {}]
  %s1 = inlined_call_operand.hbm [shape: f32[1,2048], index: 1, kind: output, shape index: {}]
  %s2 = sld [smem:[#allocation0]]
  $region2: #{tpu_custom_call.1} parent=0
    _
  %s4 = ssub.s32 1, %s2
  %s5 = scalar_select 0, %s4, %s2
  %s7 = sshll.u32 1, 14
  %s8 = sxor.u32 4294967295, %s7
  %s10 = sshll.u32 %s0, 4
  %s11 = int_to_ptr.hbm [resolvable:$true] %s10
  %s12 = sshll.u32 %s1, 4
  %s13 = int_to_ptr.hbm [resolvable:$true] %s12
  %16 = dma.general %s11, 256, %s13, [#allocation2], [#allocation3], [#allocation4], 0, 0
  %s17 = smul.u32 1, 16
  %s18 = sshll.u32 %s17, 4
  %19 = dma.done [#allocation2], %s18
  %20 = vsyncmov [#allocation2]
  %s21 = vpop.sfrf %20
  %p22 = scmp.eq.s32.totalorder %s21, 0
  %p23 = pneg %p22
  %25 = shalt.err (%p23)

</llo_original>
